<compile_context>
chip_gen: v5e
topology: v5e:2x2
jax: 0.10.0
libtpu: 0.0.40
codegen_flags: <defaults>
</compile_context>

<pallas_src>
import functools
import math

import jax
import jax.numpy as jnp
from jax.experimental import pallas as pl
from jax.experimental.pallas import tpu as pltpu

DECAY = 0.9
THRESHOLD = 1.0

_LANE_CHOICES = (8192, 4096, 2048, 1024, 512, 256, 128)
_FALLBACK_LANES = 1024
_VMEM_BUDGET_BYTES = 12 * 1024 * 1024  # headroom under the 16 MiB default scoped VMEM


# ---------------------------------------------------------------------------
# Kernels (all pure VPU elementwise on (tile_rows, lanes) f32 blocks)
# ---------------------------------------------------------------------------
def _fresh_kernel(x1_ref, x2_ref, out_ref, *, decay, threshold):
    # p1 = p2 = p3 = 0: the decayed-potential terms vanish.
    del decay
    s1 = (x1_ref[...] >= threshold).astype(jnp.float32)
    s2 = (x2_ref[...] >= threshold).astype(jnp.float32)
    out_ref[...] = ((s1 * s2) >= threshold).astype(out_ref.dtype)


def _stateful_kernel(x1_ref, x2_ref, p1_ref, p2_ref, p3_ref, out_ref, *,
                     decay, threshold):
    pot1 = decay * p1_ref[...] + x1_ref[...]
    s1 = (pot1 >= threshold).astype(jnp.float32)
    pot2 = decay * p2_ref[...] + x2_ref[...]
    s2 = (pot2 >= threshold).astype(jnp.float32)
    pot3 = decay * p3_ref[...] + s1 * s2
    out_ref[...] = (pot3 >= threshold).astype(out_ref.dtype)


def _fresh_state_kernel(x1_ref, x2_ref, out_ref, p1o_ref, p2o_ref, p3o_ref, *,
                        decay, threshold):
    del decay  # fresh potentials are zero
    pot1 = x1_ref[...]
    s1 = (pot1 >= threshold).astype(jnp.float32)
    pot2 = x2_ref[...]
    s2 = (pot2 >= threshold).astype(jnp.float32)
    pot3 = s1 * s2
    s3 = (pot3 >= threshold).astype(jnp.float32)
    out_ref[...] = s3.astype(out_ref.dtype)
    p1o_ref[...] = pot1 * (1.0 - s1)
    p2o_ref[...] = pot2 * (1.0 - s2)
    p3o_ref[...] = pot3 * (1.0 - s3)


def _stateful_state_kernel(x1_ref, x2_ref, p1_ref, p2_ref, p3_ref,
                           out_ref, p1o_ref, p2o_ref, p3o_ref, *,
                           decay, threshold):
    pot1 = decay * p1_ref[...] + x1_ref[...]
    s1 = (pot1 >= threshold).astype(jnp.float32)
    pot2 = decay * p2_ref[...] + x2_ref[...]
    s2 = (pot2 >= threshold).astype(jnp.float32)
    pot3 = decay * p3_ref[...] + s1 * s2
    s3 = (pot3 >= threshold).astype(jnp.float32)
    out_ref[...] = s3.astype(out_ref.dtype)
    p1o_ref[...] = pot1 * (1.0 - s1)
    p2o_ref[...] = pot2 * (1.0 - s2)
    p3o_ref[...] = pot3 * (1.0 - s3)


# ---------------------------------------------------------------------------
# Wrapper helpers
# ---------------------------------------------------------------------------
def _plan_slab(n, n_streams):
    """Pick (lanes, rows, tile_rows, n_pad) for a lane-dense 2-D view of n elems."""
    # Per-array tile size so (#streams x 2 buffers x tile) stays in the VMEM budget.
    tile_elems_target = max(8 * 128, _VMEM_BUDGET_BYTES // (n_streams * 2 * 4))

    lanes = None
    for cand in _LANE_CHOICES:
        if n % cand == 0:
            lanes = cand
            break
    if lanes is None:
        lanes = _FALLBACK_LANES
        n_pad = ((n + lanes - 1) // lanes) * lanes
    else:
        n_pad = n
    rows = n_pad // lanes

    tile_rows = max(8, (tile_elems_target // lanes) // 8 * 8)
    if tile_rows >= rows:
        # Single block over the full row extent (block dim == array dim is legal
        # even when rows is not a multiple of 8).
        tile_rows = rows
    return lanes, rows, tile_rows, n_pad


def _run_elementwise(kernel, slabs, rows, lanes, tile_rows, out_dtypes):
    grid = (pl.cdiv(rows, tile_rows),)
    blk = pl.BlockSpec((tile_rows, lanes), lambda i: (i, 0))
    outs = pl.pallas_call(
        kernel,
        out_shape=tuple(jax.ShapeDtypeStruct((rows, lanes), dt) for dt in out_dtypes),
        grid=grid,
        in_specs=[blk] * len(slabs),
        out_specs=tuple([blk] * len(out_dtypes)),
        compiler_params=pltpu.CompilerParams(dimension_semantics=("parallel",)),
    )(*slabs)
    return outs


def spiking_and_gate(x1, x2, p1=None, p2=None, p3=None, *,
                     decay=DECAY, threshold=THRESHOLD,
                     return_state=False, out_dtype=jnp.float32):
    """One SpikingANDGate.forward step.

    p1/p2/p3 default to 0 (fresh module). With return_state=True the reset
    post-spike potentials (p1', p2', p3') are also returned, mirroring the
    nn.Module's internal state update.
    """
    assert x1.shape == x2.shape, "x1 and x2 must have the same shape"
    orig_shape = x1.shape
    n = math.prod(orig_shape)

    fresh = (p1 is None) and (p2 is None) and (p3 is None)

    if fresh:
        kern = _fresh_state_kernel if return_state else _fresh_kernel
        n_in = 2
    else:
        kern = _stateful_state_kernel if return_state else _stateful_kernel
        n_in = 5
    n_out = 4 if return_state else 1

    lanes, rows, tile_rows, n_pad = _plan_slab(n, n_in + n_out)

    def slab(a):
        a = jnp.asarray(a, jnp.float32).reshape(-1)
        if n_pad != n:
            a = jnp.pad(a, (0, n_pad - n))
        return a.reshape(rows, lanes)

    if fresh:
        slabs = (slab(x1), slab(x2))
    else:
        def pot(p):
            return jnp.zeros(orig_shape, jnp.float32) if p is None else p
        slabs = (slab(x1), slab(x2), slab(pot(p1)), slab(pot(p2)), slab(pot(p3)))

    out_dtypes = (out_dtype,) + ((jnp.float32,) * 3 if return_state else ())
    kernel = functools.partial(kern, decay=float(decay), threshold=float(threshold))

    raw_outs = _run_elementwise(kernel, slabs, rows, lanes, tile_rows, out_dtypes)

    def unslab(o):
        o = o.reshape(-1)
        if n_pad != n:
            o = o[:n]
        return o.reshape(orig_shape)

    outs = tuple(unslab(o) for o in raw_outs)
    if return_state:
        return outs  # (spikes, p1_new, p2_new, p3_new)
    return outs[0]


# ---------------------------------------------------------------------------
# Self-check
# ---------------------------------------------------------------------------
if __name__ == "__main__":
    key = jax.random.PRNGKey(0)
    k1, k2, k3, k4, k5 = jax.random.split(key, 5)
    shape = (2, 4, 16, 16)  # NCHW-style elementwise tensor

    # Scale so some values cross the threshold of 1.0 and some do not.
    x1 = jax.random.uniform(k1, shape, jnp.float32, 0.0, 2.0)
    x2 = jax.random.uniform(k2, shape, jnp.float32, 0.0, 2.0)

    # --- Fresh-module path (specialized 2-input kernel) ---
    out = jax.block_until_ready(spiking_and_gate(x1, x2))
    s1 = (x1 >= THRESHOLD).astype(jnp.float32)
    s2 = (x2 >= THRESHOLD).astype(jnp.float32)
    ref = ((s1 * s2) >= THRESHOLD).astype(jnp.float32)
    assert out.shape == shape and out.dtype == jnp.float32
    assert bool(jnp.all(out == ref))

    # --- Stateful path (non-zero potentials exercise the decay*p term) ---
    p1 = jax.random.uniform(k3, shape, jnp.float32, 0.0, 1.5)
    p2 = jax.random.uniform(k4, shape, jnp.float32, 0.0, 1.5)
    p3 = jax.random.uniform(k5, shape, jnp.float32, 0.0, 1.5)
    out2 = jax.block_until_ready(spiking_and_gate(x1, x2, p1, p2, p3))

    rpot1 = DECAY * p1 + x1
    rs1 = (rpot1 >= THRESHOLD).astype(jnp.float32)
    rpot2 = DECAY * p2 + x2
    rs2 = (rpot2 >= THRESHOLD).astype(jnp.float32)
    rpot3 = DECAY * p3 + rs1 * rs2
    rs3 = (rpot3 >= THRESHOLD).astype(jnp.float32)
    assert out2.shape == shape and out2.dtype == jnp.float32
    assert bool(jnp.all(out2 == rs3))

    # --- Stateful path returning the reset potentials (full LIF state update) ---
    out3, np1, np2, np3 = jax.tree_util.tree_map(
        jax.block_until_ready, spiking_and_gate(x1, x2, p1, p2, p3, return_state=True))
    assert bool(jnp.all(out3 == rs3))
    assert bool(jnp.allclose(np1, rpot1 * (1.0 - rs1)))
    assert bool(jnp.allclose(np2, rpot2 * (1.0 - rs2)))
    assert bool(jnp.allclose(np3, rpot3 * (1.0 - rs3)))

    print("KERNEL_OK")
</pallas_src>

<mosaic_0001>
module attributes {stable_mosaic.version = 11 : i64} {
  func.func @_fresh_kernel(%arg0: i32, %arg1: memref<1x2048xf32, #tpu.memory_space<vmem>>, %arg2: memref<1x2048xf32, #tpu.memory_space<vmem>>, %arg3: memref<1x2048xf32, #tpu.memory_space<vmem>>) attributes {dimension_semantics = [#tpu.dimension_semantics<parallel>], iteration_bounds = array<i64: 1>, scalar_prefetch = 0 : i64, scratch_operands = 0 : i64, tpu.core_type = #tpu.core_type<tc>, window_params = [{transform_indices = @transform_0, window_bounds = array<i64: 1, 2048>}, {transform_indices = @transform_1, window_bounds = array<i64: 1, 2048>}, {transform_indices = @transform_2, window_bounds = array<i64: 1, 2048>}]} {
    %c0 = arith.constant 0 : index
    %c0_0 = arith.constant 0 : index
    %0 = vector.load %arg1[%c0, %c0_0] : memref<1x2048xf32, #tpu.memory_space<vmem>>, vector<1x2048xf32>
    %cst = arith.constant 1.000000e+00 : f32
    %1 = vector.broadcast %cst : f32 to vector<1x2048xf32>
    %2 = arith.cmpf oge, %0, %1 : vector<1x2048xf32>
    %3 = arith.extui %2 : vector<1x2048xi1> to vector<1x2048xi32>
    %4 = arith.sitofp %3 : vector<1x2048xi32> to vector<1x2048xf32>
    %c0_1 = arith.constant 0 : index
    %c0_2 = arith.constant 0 : index
    %5 = vector.load %arg2[%c0_1, %c0_2] : memref<1x2048xf32, #tpu.memory_space<vmem>>, vector<1x2048xf32>
    %cst_3 = arith.constant 1.000000e+00 : f32
    %6 = vector.broadcast %cst_3 : f32 to vector<1x2048xf32>
    %7 = arith.cmpf oge, %5, %6 : vector<1x2048xf32>
    %8 = arith.extui %7 : vector<1x2048xi1> to vector<1x2048xi32>
    %9 = arith.sitofp %8 : vector<1x2048xi32> to vector<1x2048xf32>
    %10 = arith.mulf %4, %9 : vector<1x2048xf32>
    %cst_4 = arith.constant 1.000000e+00 : f32
    %11 = vector.broadcast %cst_4 : f32 to vector<1x2048xf32>
    %12 = arith.cmpf oge, %10, %11 : vector<1x2048xf32>
    %13 = arith.extui %12 : vector<1x2048xi1> to vector<1x2048xi32>
    %14 = arith.sitofp %13 : vector<1x2048xi32> to vector<1x2048xf32>
    %c0_5 = arith.constant 0 : index
    %c0_6 = arith.constant 0 : index
    %15 = vector.load %arg3[%c0_5, %c0_6] : memref<1x2048xf32, #tpu.memory_space<vmem>>, vector<1x2048xf32>
    tpu.vector_store %arg3[%c0_5, %c0_6], %14 {strides = array<i32>} : memref<1x2048xf32, #tpu.memory_space<vmem>>, vector<1x2048xf32>,
    return
  }
  func.func @transform_0(%arg0: i32) -> (i32, i32) {
    %c0_i32 = arith.constant 0 : i32
    %c0_i32_0 = arith.constant 0 : i32
    return %arg0, %c0_i32 : i32, i32
  }
  func.func @transform_1(%arg0: i32) -> (i32, i32) {
    %c0_i32 = arith.constant 0 : i32
    %c0_i32_0 = arith.constant 0 : i32
    return %arg0, %c0_i32 : i32, i32
  }
  func.func @transform_2(%arg0: i32) -> (i32, i32) {
    %c0_i32 = arith.constant 0 : i32
    %c0_i32_0 = arith.constant 0 : i32
    return %arg0, %c0_i32 : i32, i32
  }
}

</mosaic_0001>

<llo_original>
// kernel: tpu_custom_call.1
$region0: #{tpu_custom_call.1}
  #allocation0 [shape = 'u32[]', space=smem, size = 0x4, offset = 0x4, fixed_abs, tag = 'smem constant byte address 0x4 - core index']
  #allocation1 [shape = 'u32[72,128]{1,0:T(1,128)}', space=vmem, size = 0x9000, scoped, tag = 'internal scratch']
  %s0 = inlined_call_operand.hbm [shape: f32[1,2048], index: 0, kind: input, shape index: {}]
  %s1 = inlined_call_operand.hbm [shape: f32[1,2048], index: 1, kind: input, shape index: {}]
  %s2 = inlined_call_operand.hbm [shape: f32[1,2048], index: 2, kind: output, shape index: {}]
  %s3 = sld [smem:[#allocation0]]
  $region26: #{tpu_custom_call.1} parent=0
    _
  %s5 = ssub.s32 1, %s3
  %s6 = scalar_select 0, %s5, %s3
  $region1: #{tpu_custom_call.1} parent=0
    #allocation2 [shape = 'u8[8192]{0}', space=vmem, size = 0x2000, scoped, tag = 'input window, operand 0, single buffered']
    #allocation3 [shape = 's32[1]{0}', space=sflag, size = 0x4, scoped, tag = 'scoped memory for tpu_custom_call.1']
    #allocation4 [shape = 's32[1]{0}', space=sflag, size = 0x4, scoped, tag = 'scoped memory for tpu_custom_call.1']
    #allocation5 [shape = 'u8[8192]{0}', space=vmem, size = 0x2000, scoped, tag = 'input window, operand 1, single buffered']
    #allocation6 [shape = 's32[1]{0}', space=sflag, size = 0x4, scoped, tag = 'scoped memory for tpu_custom_call.1']
    #allocation7 [shape = 'u8[8192]{0}', space=vmem, size = 0x2000, scoped, tag = 'output window, operand 0, single buffered']
    %7 = vsyncpa [#allocation3], 0
    %8 = vsyncpa [#allocation6], 0
    %9 = vsyncpa [#allocation4], 0
    // Predicated region
    $region2: #{tpu_custom_call.1} parent=1 // pred_check
      _
    $region3: #{tpu_custom_call.1} parent=1 // pred_check_branch
      %11 = sbr.rel (0) target = $region5
    $region4: #{tpu_custom_call.1} parent=1 // pred_region
      %13 = vsyncadd [#allocation3], 0
      %s15 = sshll.u32 %s0, 4
      %s16 = int_to_ptr.hbm [resolvable:$true] %s15
      %s17 = sshll.u32 [#allocation2], 4
      %s18 = int_to_ptr.vmem [resolvable:$true] %s17
      %20 = dma.hbm_to_vmem [thread:$0]  %s16, 256, %s18, [#allocation3]
    $region5: #{tpu_custom_call.1} parent=1 // pred_fallthru
      _
    // Predicated region
    $region6: #{tpu_custom_call.1} parent=1 // pred_check
      _
    $region7: #{tpu_custom_call.1} parent=1 // pred_check_branch
      %22 = sbr.rel (0) target = $region9
    $region8: #{tpu_custom_call.1} parent=1 // pred_region
      %24 = vsyncadd [#allocation6], 0
      %s26 = sshll.u32 %s1, 4
      %s27 = int_to_ptr.hbm [resolvable:$true] %s26
      %s28 = sshll.u32 [#allocation5], 4
      %s29 = int_to_ptr.vmem [resolvable:$true] %s28
      %31 = dma.hbm_to_vmem [thread:$0]  %s27, 256, %s29, [#allocation6]
    $region9: #{tpu_custom_call.1} parent=1 // pred_fallthru
      _
    // Predicated region
    $region10: #{tpu_custom_call.1} parent=1 // pred_check
      _
    $region11: #{tpu_custom_call.1} parent=1 // pred_check_branch
      %33 = sbr.rel (0) target = $region13
    $region12: #{tpu_custom_call.1} parent=1 // pred_region
      %35 = dma.done [#allocation3], 256
    $region13: #{tpu_custom_call.1} parent=1 // pred_fallthru
      _
    // Predicated region
    $region14: #{tpu_custom_call.1} parent=1 // pred_check
      _
    $region15: #{tpu_custom_call.1} parent=1 // pred_check_branch
      %37 = sbr.rel (0) target = $region17
    $region16: #{tpu_custom_call.1} parent=1 // pred_region
      %39 = dma.done [#allocation6], 256
    $region17: #{tpu_custom_call.1} parent=1 // pred_fallthru
      _
    %v40 = vld [vmem:[#allocation2] sm:$0xff]
    %v41 = vld [vmem:[#allocation2 + $0x8] sm:$0xff]
    %vm42 = vcmp.ge.f32.partialorder %v40, 1.0
    %vm43 = vcmp.ge.f32.partialorder %v41, 1.0
    %v44 = vsel %vm42, 1, 0
    %v45 = vsel %vm43, 1, 0
    %v46 = vcvt.s32.f32 %v44
    %v47 = vcvt.s32.f32 %v45
    %v48 = vld [vmem:[#allocation5] sm:$0xff]
    %v49 = vld [vmem:[#allocation5 + $0x8] sm:$0xff]
    %vm50 = vcmp.ge.f32.partialorder %v48, 1.0
    %vm51 = vcmp.ge.f32.partialorder %v49, 1.0
    %v52 = vsel %vm50, 1, 0
    %v53 = vsel %vm51, 1, 0
    %v54 = vcvt.s32.f32 %v52
    %v55 = vcvt.s32.f32 %v53
    %v56 = vmul.f32 %v46, %v54
    %v57 = vmul.f32 %v47, %v55
    %vm58 = vcmp.ge.f32.partialorder %v56, 1.0
    %vm59 = vcmp.ge.f32.partialorder %v57, 1.0
    %v60 = vsel %vm58, 1, 0
    %v61 = vsel %vm59, 1, 0
    %v62 = vcvt.s32.f32 %v60
    %v63 = vcvt.s32.f32 %v61
    %64 = vst [vmem:[#allocation7] sm:$0xff] %v62
    %65 = vst [vmem:[#allocation7 + $0x8] sm:$0xff] %v63
    // Predicated region
    $region18: #{tpu_custom_call.1} parent=1 // pred_check
      _
    $region19: #{tpu_custom_call.1} parent=1 // pred_check_branch
      %67 = sbr.rel (0) target = $region21
    $region20: #{tpu_custom_call.1} parent=1 // pred_region
      %69 = vsyncadd [#allocation4], 0
      %s71 = sshll.u32 [#allocation7], 4
      %s72 = int_to_ptr.vmem [resolvable:$true] %s71
      %s73 = sshll.u32 %s2, 4
      %s74 = int_to_ptr.hbm [resolvable:$true] %s73
      %76 = dma.vmem_to_hbm [thread:$0]  %s72, 256, %s74, [#allocation4]
    $region21: #{tpu_custom_call.1} parent=1 // pred_fallthru
      _
    // Predicated region
    $region22: #{tpu_custom_call.1} parent=1 // pred_check
      _
    $region23: #{tpu_custom_call.1} parent=1 // pred_check_branch
      %78 = sbr.rel (0) target = $region25
    $region24: #{tpu_custom_call.1} parent=1 // pred_region
      %80 = dma.done [#allocation4], 256
    $region25: #{tpu_custom_call.1} parent=1 // pred_fallthru
      _
    %81 = vsyncpa [#allocation3], 1
    %82 = vsyncpa [#allocation6], 1
    %83 = vsyncpa [#allocation4], 1

</llo_original>
